<compile_context>
chip_gen: v5e
topology: v5e:2x2
jax: 0.10.0
libtpu: 0.0.40
codegen_flags: <defaults>
</compile_context>

<pallas_src>
import math
from functools import partial

import jax
import jax.numpy as jnp
from jax.experimental import pallas as pl
from jax.experimental.pallas import tpu as pltpu

_INV_SQRT2 = 1.0 / math.sqrt(2.0)
_TANH_C = math.sqrt(2.0 / math.pi)


def _gelu(x, approx):
    if approx:
        # tanh approximation: transcendental lands on the EUP slot (free-ish).
        return 0.5 * x * (1.0 + jnp.tanh(_TANH_C * (x + 0.044715 * x * x * x)))
    # nn.GELU default is the exact (erf) formulation; keep the math in f32.
    return 0.5 * x * (1.0 + jax.lax.erf(x * _INV_SQRT2))


def _round_up(x, m):
    return ((x + m - 1) // m) * m


def _sublane_min(dtype):
    # minimum sublane tile: 8 for 4-byte, 16 for 2-byte, 32 for 1-byte dtypes
    return {4: 8, 2: 16, 1: 32}.get(jnp.dtype(dtype).itemsize, 8)


def _vmem_budget_bytes():
    """~70% of physical VMEM; assume 64 MiB (v7x per-core) when unknown."""
    cap = 64 * 1024 * 1024
    try:
        cap = int(pltpu.get_tpu_info().vmem_capacity_bytes)
    except Exception:  # query unavailable -> stay conservative (v7x-safe)
        pass
    return int(cap * 0.70)


def _pick_tm(M, sub, tm_max=1024):
    """Row tile: >=2 tiles when possible (v7x has 2 TCs), low padding waste."""
    tm_max = max(sub, (tm_max // sub) * sub)
    if M <= tm_max:
        if M > sub:                       # split so both TensorCores get work
            return _round_up((M + 1) // 2, sub)
        return _round_up(M, sub)
    best_tm, best_waste = sub, _round_up(M, sub) - M
    for cand in range(tm_max, sub - 1, -sub):
        waste = _round_up(M, cand) - M
        if waste * 16 <= M:               # largest tile with <=6.25% row padding
            return cand
        if waste < best_waste:
            best_tm, best_waste = cand, waste
    return best_tm


def _mlp_kernel_resident(x_ref, w1_ref, b1_ref, w2_ref, b2_ref, o_ref, *, approx):
    # Full w1/w2 live in VMEM (constant index maps -> DMA'd once for the whole
    # grid); each step computes one (tm, C_out) row tile end-to-end.
    h = jnp.dot(x_ref[...], w1_ref[...], preferred_element_type=jnp.float32)
    h = _gelu(h + b1_ref[...].astype(jnp.float32), approx)
    out = jnp.dot(h.astype(w2_ref.dtype), w2_ref[...],
                  preferred_element_type=jnp.float32)
    o_ref[...] = (out + b2_ref[...].astype(jnp.float32)).astype(o_ref.dtype)


def _mlp_kernel_blocked(x_ref, w1_ref, b1_ref, w2_ref, b2_ref, o_ref, acc_ref,
                        *, approx):
    # x_ref: (tm, C_in)   w1_ref: (C_in, th)  b1_ref: (1, th)
    # w2_ref: (th, C_out) b2_ref: (1, C_out)  o_ref:  (tm, C_out)
    # acc_ref: (tm, C_out) f32 accumulator, resident across the h grid axis.
    h_idx = pl.program_id(1)

    @pl.when(h_idx == 0)
    def _init():
        acc_ref[...] = jnp.zeros_like(acc_ref)

    h = jnp.dot(x_ref[...], w1_ref[...], preferred_element_type=jnp.float32)
    h = _gelu(h + b1_ref[...].astype(jnp.float32), approx)
    # dropout(p=0.0) is the identity -> nothing to do.
    acc_ref[...] += jnp.dot(h.astype(w2_ref.dtype), w2_ref[...],
                            preferred_element_type=jnp.float32)

    @pl.when(h_idx == pl.num_programs(1) - 1)
    def _finalize():
        o_ref[...] = (acc_ref[...]
                      + b2_ref[...].astype(jnp.float32)).astype(o_ref.dtype)


def mlp_pallas(x, w1, b1, w2, b2, *, tm=None, th=None, approx_gelu=False,
               compute_dtype=None, vmem_limit_bytes=None):
    """x: (..., C_in) -> (..., C_out).

    Weights are stored as (in, out), i.e. already transposed relative to
    PyTorch's nn.Linear (out, in) layout, so the kernel computes x @ W + b.
    """
    if compute_dtype is not None:
        x, w1, b1, w2, b2 = (a.astype(compute_dtype) for a in (x, w1, b1, w2, b2))

    orig_shape = x.shape
    C_in = orig_shape[-1]
    H = w1.shape[1]
    C_out = w2.shape[1]
    M = 1
    for d in orig_shape[:-1]:
        M *= d

    xb = jnp.dtype(x.dtype).itemsize
    wb = jnp.dtype(w1.dtype).itemsize
    ob = xb
    sub = _sublane_min(x.dtype)
    budget = _vmem_budget_bytes()
    limit = int(vmem_limit_bytes) if vmem_limit_bytes is not None else budget

    tm_max = 1024 if tm is None else max(sub, (int(tm) // sub) * sub)
    tm_ = _pick_tm(M, sub, tm_max)

    # Double-buffered BlockSpec traffic + compiler temporaries (f32 hidden slab
    # and its weight-dtype cast) for each path.
    def resident_fp(t):
        f = 2 * (t * C_in * xb + C_in * H * wb + H * wb
                 + H * C_out * wb + C_out * wb + t * C_out * ob)
        return f + t * H * (4 + wb)

    def blocked_fp(t, hh):
        f = 2 * (t * C_in * xb + C_in * hh * wb + hh * wb
                 + hh * C_out * wb + C_out * wb + t * C_out * ob)
        return f + t * C_out * 4 + t * hh * (4 + wb)

    # ---- Weights-resident fast path (preferred whenever it fits) ------------
    res_tm = None
    if th is None:
        cand = tm_
        floor = max(sub, min(tm_, 128))
        while cand >= floor:
            if resident_fp(cand) <= budget:
                res_tm = cand
                break
            nxt = _round_up(cand // 2, sub)
            if nxt >= cand:
                break
            cand = nxt

    x2d = x.reshape(M, C_in)
    b1_2d = b1.reshape(1, H)
    b2_2d = b2.reshape(1, C_out)

    if res_tm is not None:
        tm_ = res_tm
        Mp = _round_up(M, tm_)
        if Mp != M:
            x2d = jnp.pad(x2d, ((0, Mp - M), (0, 0)))
        out2d = pl.pallas_call(
            partial(_mlp_kernel_resident, approx=approx_gelu),
            out_shape=jax.ShapeDtypeStruct((Mp, C_out), x.dtype),
            grid_spec=pltpu.PrefetchScalarGridSpec(
                num_scalar_prefetch=0,
                grid=(Mp // tm_,),
                in_specs=[
                    pl.BlockSpec((tm_, C_in), lambda i: (i, 0)),   # x rows
                    pl.BlockSpec((C_in, H), lambda i: (0, 0)),     # w1 (resident)
                    pl.BlockSpec((1, H), lambda i: (0, 0)),        # b1 (resident)
                    pl.BlockSpec((H, C_out), lambda i: (0, 0)),    # w2 (resident)
                    pl.BlockSpec((1, C_out), lambda i: (0, 0)),    # b2 (resident)
                ],
                out_specs=pl.BlockSpec((tm_, C_out), lambda i: (i, 0)),
            ),
            compiler_params=pltpu.CompilerParams(
                dimension_semantics=("parallel",),
                vmem_limit_bytes=limit),
        )(x2d, w1, b1_2d, w2, b2_2d)
    else:
        # ---- Hidden-blocked fallback (weights streamed in th-wide slabs) ----
        if th is not None:
            th_ = max(128, (int(th) // 128) * 128)
            Hp = _round_up(H, th_)
        else:
            Hp = _round_up(H, 128)
            th_ = 128
            for cand in range(min(1024, Hp), 127, -128):
                if Hp % cand == 0 and blocked_fp(tm_, cand) <= budget:
                    th_ = cand
                    break
        while blocked_fp(tm_, th_) > budget and tm_ > sub:
            tm_ = max(sub, _round_up(tm_ // 2, sub))

        Mp = _round_up(M, tm_)
        if Mp != M:
            x2d = jnp.pad(x2d, ((0, Mp - M), (0, 0)))
        if Hp != H:
            # Zero-padded hidden columns give gelu(0)=0 times zero rows of w2,
            # i.e. contribute exactly 0 -> results are unchanged.
            w1 = jnp.pad(w1, ((0, 0), (0, Hp - H)))
            b1_2d = jnp.pad(b1_2d, ((0, 0), (0, Hp - H)))
            w2 = jnp.pad(w2, ((0, Hp - H), (0, 0)))

        out2d = pl.pallas_call(
            partial(_mlp_kernel_blocked, approx=approx_gelu),
            out_shape=jax.ShapeDtypeStruct((Mp, C_out), x.dtype),
            grid_spec=pltpu.PrefetchScalarGridSpec(
                num_scalar_prefetch=0,
                grid=(Mp // tm_, Hp // th_),
                in_specs=[
                    pl.BlockSpec((tm_, C_in), lambda i, h: (i, 0)),   # x rows
                    pl.BlockSpec((C_in, th_), lambda i, h: (0, h)),   # w1 slab
                    pl.BlockSpec((1, th_), lambda i, h: (0, h)),      # b1 slab
                    pl.BlockSpec((th_, C_out), lambda i, h: (h, 0)),  # w2 slab
                    pl.BlockSpec((1, C_out), lambda i, h: (0, 0)),    # b2
                ],
                out_specs=pl.BlockSpec((tm_, C_out), lambda i, h: (i, 0)),
                scratch_shapes=[pltpu.VMEM((tm_, C_out), jnp.float32)],
            ),
            compiler_params=pltpu.CompilerParams(
                dimension_semantics=("parallel", "arbitrary"),
                vmem_limit_bytes=limit),
        )(x2d, w1, b1_2d, w2, b2_2d)

    if Mp != M:
        out2d = out2d[:M]
    return out2d.reshape(orig_shape[:-1] + (C_out,))


def init_mlp_params(key, in_features, hidden_features, out_features,
                    dtype=jnp.float32):
    """Deterministic synthetic init (PyTorch Linear-style uniform bounds)."""
    k1, k2, k3, k4 = jax.random.split(key, 4)
    bound1 = 1.0 / math.sqrt(in_features)
    bound2 = 1.0 / math.sqrt(hidden_features)
    # stored as (in, out) so the kernel does x @ W
    w1 = jax.random.uniform(k1, (in_features, hidden_features), dtype, -bound1, bound1)
    b1 = jax.random.uniform(k2, (hidden_features,), dtype, -bound1, bound1)
    w2 = jax.random.uniform(k3, (hidden_features, out_features), dtype, -bound2, bound2)
    b2 = jax.random.uniform(k4, (out_features,), dtype, -bound2, bound2)
    return w1, b1, w2, b2


if __name__ == "__main__":
    key = jax.random.PRNGKey(0)
    kx, kp, kx2, kp2 = jax.random.split(key, 4)

    def ref_mlp(x, w1, b1, w2, b2):
        h = jnp.dot(x, w1) + b1
        h = 0.5 * h * (1.0 + jax.lax.erf(h / jnp.sqrt(2.0)))
        return jnp.dot(h, w2) + b2          # dropout(p=0.0) is identity

    # Test 1: weights-resident fast path. Shapes consistent with transformer
    # MLP usage (B, N, C); channel dims are multiples of 128 (lane-dense).
    B, N = 2, 8
    in_f, hid_f, out_f = 128, 256, 128
    x = jax.random.normal(kx, (B, N, in_f), dtype=jnp.float32)
    w1, b1, w2, b2 = init_mlp_params(kp, in_f, hid_f, out_f)
    out = jax.block_until_ready(mlp_pallas(x, w1, b1, w2, b2))
    ref = ref_mlp(x, w1, b1, w2, b2)
    assert out.shape == ref.shape
    assert jnp.allclose(out, ref, atol=5e-3, rtol=5e-3), "resident path mismatch"

    # Test 2: hidden-blocked path with row padding (M=15) and hidden padding
    # (H=192 -> 256), forced via an explicit th.
    x2 = jax.random.normal(kx2, (3, 5, in_f), dtype=jnp.float32)
    w1b, b1b, w2b, b2b = init_mlp_params(kp2, in_f, 192, out_f)
    out2 = jax.block_until_ready(mlp_pallas(x2, w1b, b1b, w2b, b2b, th=128))
    ref2 = ref_mlp(x2, w1b, b1b, w2b, b2b)
    assert out2.shape == ref2.shape
    assert jnp.allclose(out2, ref2, atol=5e-3, rtol=5e-3), "blocked path mismatch"

    print("KERNEL_OK")
</pallas_src>

<mosaic_0001>
module attributes {stable_mosaic.version = 11 : i64} {
  func.func @_mlp_kernel_resident(%arg0: i32, %arg1: memref<8x128xf32, #tpu.memory_space<vmem>>, %arg2: memref<128x256xf32, #tpu.memory_space<vmem>>, %arg3: memref<1x256xf32, #tpu.memory_space<vmem>>, %arg4: memref<256x128xf32, #tpu.memory_space<vmem>>, %arg5: memref<1x128xf32, #tpu.memory_space<vmem>>, %arg6: memref<8x128xf32, #tpu.memory_space<vmem>>) attributes {dimension_semantics = [#tpu.dimension_semantics<parallel>], iteration_bounds = array<i64: 2>, scalar_prefetch = 0 : i64, scratch_operands = 0 : i64, tpu.core_type = #tpu.core_type<tc>, window_params = [{transform_indices = @transform_0, window_bounds = array<i64: 8, 128>}, {pipeline_mode = #tpu.pipeline_mode<synchronous>, transform_indices = @transform_1, window_bounds = array<i64: 128, 256>}, {pipeline_mode = #tpu.pipeline_mode<synchronous>, transform_indices = @transform_2, window_bounds = array<i64: 1, 256>}, {pipeline_mode = #tpu.pipeline_mode<synchronous>, transform_indices = @transform_3, window_bounds = array<i64: 256, 128>}, {pipeline_mode = #tpu.pipeline_mode<synchronous>, transform_indices = @transform_4, window_bounds = array<i64: 1, 128>}, {transform_indices = @transform_5, window_bounds = array<i64: 8, 128>}]} {
    %c0 = arith.constant 0 : index
    %c0_0 = arith.constant 0 : index
    %0 = vector.load %arg1[%c0, %c0_0] : memref<8x128xf32, #tpu.memory_space<vmem>>, vector<8x128xf32>
    %c0_1 = arith.constant 0 : index
    %c0_2 = arith.constant 0 : index
    %1 = vector.load %arg2[%c0_1, %c0_2] : memref<128x256xf32, #tpu.memory_space<vmem>>, vector<128x256xf32>
    %cst = arith.constant dense<0.000000e+00> : vector<8x256xf32>
    %2 = tpu.matmul %0, %1, %cst {dimension_numbers = #tpu.dot_dimension_numbers<[1], [0], [0], [1], [0, 0, 1, 1], [], []>} : vector<8x128xf32>, vector<128x256xf32>, vector<8x256xf32> -> vector<8x256xf32>
    %c0_3 = arith.constant 0 : index
    %c0_4 = arith.constant 0 : index
    %3 = vector.load %arg3[%c0_3, %c0_4] : memref<1x256xf32, #tpu.memory_space<vmem>>, vector<1x256xf32>
    %4 = vector.broadcast %3 : vector<1x256xf32> to vector<8x256xf32>
    %5 = arith.addf %2, %4 : vector<8x256xf32>
    %cst_5 = arith.constant 5.000000e-01 : f32
    %6 = vector.broadcast %cst_5 : f32 to vector<8x256xf32>
    %7 = arith.mulf %6, %5 : vector<8x256xf32>
    %cst_6 = arith.constant 0.707106769 : f32
    %8 = vector.broadcast %cst_6 : f32 to vector<8x256xf32>
    %9 = arith.mulf %5, %8 : vector<8x256xf32>
    %10 = math.erf %9 : vector<8x256xf32>
    %cst_7 = arith.constant 1.000000e+00 : f32
    %11 = vector.broadcast %cst_7 : f32 to vector<8x256xf32>
    %12 = arith.addf %11, %10 : vector<8x256xf32>
    %13 = arith.mulf %7, %12 : vector<8x256xf32>
    %c0_8 = arith.constant 0 : index
    %c0_9 = arith.constant 0 : index
    %14 = vector.load %arg4[%c0_8, %c0_9] : memref<256x128xf32, #tpu.memory_space<vmem>>, vector<256x128xf32>
    %cst_10 = arith.constant dense<0.000000e+00> : vector<8x128xf32>
    %15 = tpu.matmul %13, %14, %cst_10 {dimension_numbers = #tpu.dot_dimension_numbers<[1], [0], [0], [1], [0, 0, 1, 1], [], []>} : vector<8x256xf32>, vector<256x128xf32>, vector<8x128xf32> -> vector<8x128xf32>
    %c0_11 = arith.constant 0 : index
    %c0_12 = arith.constant 0 : index
    %16 = vector.load %arg5[%c0_11, %c0_12] : memref<1x128xf32, #tpu.memory_space<vmem>>, vector<1x128xf32>
    %17 = vector.broadcast %16 : vector<1x128xf32> to vector<8x128xf32>
    %18 = arith.addf %15, %17 : vector<8x128xf32>
    %c0_13 = arith.constant 0 : index
    %c0_14 = arith.constant 0 : index
    %19 = vector.load %arg6[%c0_13, %c0_14] : memref<8x128xf32, #tpu.memory_space<vmem>>, vector<8x128xf32>
    tpu.vector_store %arg6[%c0_13, %c0_14], %18 {strides = array<i32>} : memref<8x128xf32, #tpu.memory_space<vmem>>, vector<8x128xf32>,
    return
  }
  func.func @transform_0(%arg0: i32) -> (i32, i32) {
    %c0_i32 = arith.constant 0 : i32
    %c0_i32_0 = arith.constant 0 : i32
    return %arg0, %c0_i32 : i32, i32
  }
  func.func @transform_1(%arg0: i32) -> (i32, i32) {
    %c0_i32 = arith.constant 0 : i32
    %c0_i32_0 = arith.constant 0 : i32
    %c0_i32_1 = arith.constant 0 : i32
    return %c0_i32, %c0_i32_0 : i32, i32
  }
  func.func @transform_2(%arg0: i32) -> (i32, i32) {
    %c0_i32 = arith.constant 0 : i32
    %c0_i32_0 = arith.constant 0 : i32
    %c0_i32_1 = arith.constant 0 : i32
    return %c0_i32, %c0_i32_0 : i32, i32
  }
  func.func @transform_3(%arg0: i32) -> (i32, i32) {
    %c0_i32 = arith.constant 0 : i32
    %c0_i32_0 = arith.constant 0 : i32
    %c0_i32_1 = arith.constant 0 : i32
    return %c0_i32, %c0_i32_0 : i32, i32
  }
  func.func @transform_4(%arg0: i32) -> (i32, i32) {
    %c0_i32 = arith.constant 0 : i32
    %c0_i32_0 = arith.constant 0 : i32
    %c0_i32_1 = arith.constant 0 : i32
    return %c0_i32, %c0_i32_0 : i32, i32
  }
  func.func @transform_5(%arg0: i32) -> (i32, i32) {
    %c0_i32 = arith.constant 0 : i32
    %c0_i32_0 = arith.constant 0 : i32
    return %arg0, %c0_i32 : i32, i32
  }
}

</mosaic_0001>

<llo_original>
// kernel: tpu_custom_call.1
$region0: #{tpu_custom_call.1}
  #allocation0 [shape = 'u32[]', space=smem, size = 0x4, offset = 0x4, fixed_abs, tag = 'smem constant byte address 0x4 - core index']
  #allocation1 [shape = 'u32[72,128]{1,0:T(1,128)}', space=vmem, size = 0x9000, scoped, tag = 'internal scratch']
  %s0 = inlined_call_operand.hbm [shape: f32[16,128], index: 0, kind: input, shape index: {}]
  %s1 = inlined_call_operand.hbm [shape: f32[128,256], index: 1, kind: input, shape index: {}]
  %s2 = inlined_call_operand.hbm [shape: f32[1,256], index: 2, kind: input, shape index: {}]
  %s3 = inlined_call_operand.hbm [shape: f32[256,128], index: 3, kind: input, shape index: {}]
  %s4 = inlined_call_operand.vmem [shape: f32[1,128], index: 4, kind: input, shape index: {}]
  %s5 = inlined_call_operand.hbm [shape: f32[16,128], index: 5, kind: output, shape index: {}]
  %s6 = sld [smem:[#allocation0]]
  $region69: #{tpu_custom_call.1} parent=0
    _
  %s8 = ssub.s32 1, %s6
  %s9 = scalar_select 0, %s8, %s6
  $region1: #{tpu_custom_call.1} parent=0
    #allocation2 [shape = 'u8[8192]{0}', space=vmem, size = 0x2000, scoped, tag = 'input window, operand 0']
    #allocation3 [shape = 's32[2]{0}', space=sflag, size = 0x8, scoped, tag = 'scoped memory for tpu_custom_call.1']
    #allocation4 [shape = 's32[2]{0}', space=sflag, size = 0x8, scoped, tag = 'scoped memory for tpu_custom_call.1']
    #allocation5 [shape = 'u8[131072]{0}', space=vmem, size = 0x20000, scoped, tag = 'input window, operand 1, single buffered']
    #allocation6 [shape = 's32[1]{0}', space=sflag, size = 0x4, scoped, tag = 'scoped memory for tpu_custom_call.1']
    #allocation7 [shape = 'u8[1024]{0}', space=vmem, size = 0x400, scoped, tag = 'input window, operand 2, single buffered']
    #allocation8 [shape = 'u8[131072]{0}', space=vmem, size = 0x20000, scoped, tag = 'input window, operand 3, single buffered']
    #allocation9 [shape = 's32[1]{0}', space=sflag, size = 0x4, scoped, tag = 'scoped memory for tpu_custom_call.1']
    #allocation10 [shape = 'u8[8192]{0}', space=vmem, size = 0x2000, scoped, tag = 'output window, operand 0']
    %10 = vsyncpa [#allocation3], 0
    %s11 = scalar_lea.sflag [#allocation3], 1
    %12 = vsyncpa %s11, 0
    %13 = vsyncpa [#allocation6], 0
    %14 = vsyncpa [#allocation9], 0
    %15 = vsyncpa [#allocation4], 0
    %s16 = scalar_lea.sflag [#allocation4], 1
    %17 = vsyncpa %s16, 0
    loop: start=0, step=1, limit=4
    $region2: #{tpu_custom_call.1} parent=1 // loop_pre_header
      _
    $region3: #{tpu_custom_call.1} parent=1 // loop_header
      %s19 = sphi 0, %s23
      %p20 = scmp.ge.s32.totalorder %s19, 4
      %s29 = sphi 0, %s31
      %s32 = sphi 0, %s29
      %s33 = sphi 0, %s32
      %s49 = sphi 0, %s33
      %s53 = sphi 0, %s53
      %s55 = sphi 0, %s53
      %s56 = sphi 0, %s55
      %s70 = sphi 0, %s56
      %s74 = sphi 0, %s74
      %s76 = sphi 0, %s74
      %s77 = sphi 0, %s76
      %s91 = sphi 0, %s77
      %s95 = sphi 0, %s95
      %s97 = sphi 0, %s95
      %s98 = sphi 0, %s97
      %s112 = sphi 0, %s98
      %s116 = sphi 0, %s116
      %s118 = sphi 0, %s116
      %s119 = sphi 0, %s118
      %s133 = sphi 0, %s119
      %s139 = sphi 0, %s141
      %s142 = sphi 0, %s139
      %s143 = sphi 0, %s142
      %s159 = sphi 0, %s143
    $region4: #{tpu_custom_call.1} parent=1 // loop_header_branch
      %22 = sbr.rel (%p20) target = $region8
    $region5: #{tpu_custom_call.1} parent=1 // loop_body
      %s24 = ssub.s32 %s19, 1
      %s25 = ssub.s32 %s19, 2
      %s26 = sadd.s32 %s19, 1
      %s27 = ssub.s32 %s19, %s26
      %p28 = scmp.eq.s32.totalorder %s27, 0
      %s30 = sadd.s32 %s29, 1
      %s31 = scalar_select %p28, %s29, %s30
      %p34 = pneg %p28
      %p35 = scmp.eq.s32.totalorder %s19, 1
      %p36 = por %p34, %p35
      %p37 = scmp.ne.s32.totalorder %s29, %s32
      %p38 = scmp.eq.s32.totalorder %s19, 0
      %p39 = por %p37, %p38
      %p40 = scmp.ne.s32.totalorder %s29, %s32
      %p41 = scmp.eq.s32.totalorder %s24, 1
      %p42 = por %p40, %p41
      %p43 = scmp.ne.s32.totalorder %s32, %s33
      %p44 = scmp.eq.s32.totalorder %s24, 0
      %p45 = por %p43, %p44
      %p46 = scmp.ne.s32.totalorder %s32, %s33
      %p47 = scmp.eq.s32.totalorder %s25, 1
      %p48 = por %p46, %p47
      %p50 = scmp.ne.s32.totalorder %s33, %s49
      %p51 = scmp.eq.s32.totalorder %s25, 0
      %p52 = por %p50, %p51
      %s54 = sadd.s32 %s53, 1
      %p57 = scmp.eq.s32.totalorder %s19, 1
      %p58 = scmp.ne.s32.totalorder %s53, %s55
      %p59 = scmp.eq.s32.totalorder %s19, 0
      %p60 = por %p58, %p59
      %p61 = scmp.ne.s32.totalorder %s53, %s55
      %p62 = scmp.eq.s32.totalorder %s24, 1
      %p63 = por %p61, %p62
      %p64 = scmp.ne.s32.totalorder %s55, %s56
      %p65 = scmp.eq.s32.totalorder %s24, 0
      %p66 = por %p64, %p65
      %p67 = scmp.ne.s32.totalorder %s55, %s56
      %p68 = scmp.eq.s32.totalorder %s25, 1
      %p69 = por %p67, %p68
      %p71 = scmp.ne.s32.totalorder %s56, %s70
      %p72 = scmp.eq.s32.totalorder %s25, 0
      %p73 = por %p71, %p72
      %s75 = sadd.s32 %s74, 1
      %p78 = scmp.eq.s32.totalorder %s19, 1
      %p79 = scmp.ne.s32.totalorder %s74, %s76
      %p80 = scmp.eq.s32.totalorder %s19, 0
      %p81 = por %p79, %p80
      %p82 = scmp.ne.s32.totalorder %s74, %s76
      %p83 = scmp.eq.s32.totalorder %s24, 1
      %p84 = por %p82, %p83
      %p85 = scmp.ne.s32.totalorder %s76, %s77
      %p86 = scmp.eq.s32.totalorder %s24, 0
      %p87 = por %p85, %p86
      %p88 = scmp.ne.s32.totalorder %s76, %s77
      %p89 = scmp.eq.s32.totalorder %s25, 1
      %p90 = por %p88, %p89
      %p92 = scmp.ne.s32.totalorder %s77, %s91
      %p93 = scmp.eq.s32.totalorder %s25, 0
      %p94 = por %p92, %p93
      %s96 = sadd.s32 %s95, 1
      %p99 = scmp.eq.s32.totalorder %s19, 1
      %p100 = scmp.ne.s32.totalorder %s95, %s97
      %p101 = scmp.eq.s32.totalorder %s19, 0
      %p102 = por %p100, %p101
      %p103 = scmp.ne.s32.totalorder %s95, %s97
      %p104 = scmp.eq.s32.totalorder %s24, 1
      %p105 = por %p103, %p104
      %p106 = scmp.ne.s32.totalorder %s97, %s98
      %p107 = scmp.eq.s32.totalorder %s24, 0
      %p108 = por %p106, %p107
      %p109 = scmp.ne.s32.totalorder %s97, %s98
      %p110 = scmp.eq.s32.totalorder %s25, 1
      %p111 = por %p109, %p110
      %p113 = scmp.ne.s32.totalorder %s98, %s112
      %p114 = scmp.eq.s32.totalorder %s25, 0
      %p115 = por %p113, %p114
      %s117 = sadd.s32 %s116, 1
      %p120 = scmp.eq.s32.totalorder %s19, 1
      %p121 = scmp.ne.s32.totalorder %s116, %s118
      %p122 = scmp.eq.s32.totalorder %s19, 0
      %p123 = por %p121, %p122
      %p124 = scmp.ne.s32.totalorder %s116, %s118
      %p125 = scmp.eq.s32.totalorder %s24, 1
      %p126 = por %p124, %p125
      %p127 = scmp.ne.s32.totalorder %s118, %s119
      %p128 = scmp.eq.s32.totalorder %s24, 0
      %p129 = por %p127, %p128
      %p130 = scmp.ne.s32.totalorder %s118, %s119
      %p131 = scmp.eq.s32.totalorder %s25, 1
      %p132 = por %p130, %p131
      %p134 = scmp.ne.s32.totalorder %s119, %s133
      %p135 = scmp.eq.s32.totalorder %s25, 0
      %p136 = por %p134, %p135
      %s137 = ssub.s32 %s19, %s26
      %p138 = scmp.eq.s32.totalorder %s137, 0
      %s140 = sadd.s32 %s139, 1
      %s141 = scalar_select %p138, %s139, %s140
      %p144 = pneg %p138
      %p145 = scmp.eq.s32.totalorder %s19, 1
      %p146 = por %p144, %p145
      %p147 = scmp.ne.s32.totalorder %s139, %s142
      %p148 = scmp.eq.s32.totalorder %s19, 0
      %p149 = por %p147, %p148
      %p150 = scmp.ne.s32.totalorder %s139, %s142
      %p151 = scmp.eq.s32.totalorder %s24, 1
      %p152 = por %p150, %p151
      %p153 = scmp.ne.s32.totalorder %s142, %s143
      %p154 = scmp.eq.s32.totalorder %s24, 0
      %p155 = por %p153, %p154
      %p156 = scmp.ne.s32.totalorder %s142, %s143
      %p157 = scmp.eq.s32.totalorder %s25, 1
      %p158 = por %p156, %p157
      %p160 = scmp.ne.s32.totalorder %s143, %s159
      %p161 = scmp.eq.s32.totalorder %s25, 0
      %p162 = por %p160, %p161
      %p163 = scmp.le.s32.totalorder 1, %s19
      %p164 = scmp.lt.s32.totalorder %s19, 3
      %p165 = pnand %p163, %p164
      %p166 = pneg %p165
      // Predicated region
      $region9: #{tpu_custom_call.1} parent=5 // pred_check
        _
      $region10: #{tpu_custom_call.1} parent=5 // pred_check_branch
        %168 = sbr.rel (%p165) target = $region12
      $region11: #{tpu_custom_call.1} parent=5 // pred_region
        %s169 = ssub.s32 %s19, 1
        // Predicated region
        $region13: #{tpu_custom_call.1} parent=11 // pred_check
          %p170 = pneg %p66
        $region14: #{tpu_custom_call.1} parent=11 // pred_check_branch
          %172 = sbr.rel (%p170) target = $region16
        $region15: #{tpu_custom_call.1} parent=11 // pred_region
          %174 = vsyncadd [#allocation6], 0
          %s175 = sshll.u32 %s1, 4
          %s176 = int_to_ptr.hbm [resolvable:$true] %s175
          %s177 = sshll.u32 [#allocation5], 4
          %s178 = int_to_ptr.vmem [resolvable:$true] %s177
          %183 = dma.hbm_to_vmem [thread:$0]  %s176, 4096, %s178, [#allocation6], 256, 256, 16
        $region16: #{tpu_custom_call.1} parent=11 // pred_fallthru
          _
        // Predicated region
        $region17: #{tpu_custom_call.1} parent=11 // pred_check
          %p184 = pneg %p87
        $region18: #{tpu_custom_call.1} parent=11 // pred_check_branch
          %186 = sbr.rel (%p184) target = $region20
        $region19: #{tpu_custom_call.1} parent=11 // pred_region
          %188 = vsyncadd [#allocation6], 0
          %s190 = sshll.u32 %s2, 4
          %s191 = int_to_ptr.hbm [resolvable:$true] %s190
          %s192 = sshll.u32 [#allocation7], 4
          %s193 = int_to_ptr.vmem [resolvable:$true] %s192
          %195 = dma.hbm_to_vmem [thread:$0]  %s191, 32, %s193, [#allocation6]
        $region20: #{tpu_custom_call.1} parent=11 // pred_fallthru
          _
        // Predicated region
        $region21: #{tpu_custom_call.1} parent=11 // pred_check
          %p196 = pneg %p108
        $region22: #{tpu_custom_call.1} parent=11 // pred_check_branch
          %198 = sbr.rel (%p196) target = $region24
        $region23: #{tpu_custom_call.1} parent=11 // pred_region
          %200 = vsyncadd [#allocation9], 0
          %s201 = sshll.u32 %s3, 4
          %s202 = int_to_ptr.hbm [resolvable:$true] %s201
          %s203 = sshll.u32 [#allocation8], 4
          %s204 = int_to_ptr.vmem [resolvable:$true] %s203
          %209 = dma.hbm_to_vmem [thread:$0]  %s202, 4096, %s204, [#allocation9], 128, 128, 8
        $region24: #{tpu_custom_call.1} parent=11 // pred_fallthru
          _
        // Predicated region
        $region25: #{tpu_custom_call.1} parent=11 // pred_check
          %p210 = pneg %p129
        $region26: #{tpu_custom_call.1} parent=11 // pred_check_branch
          %212 = sbr.rel (%p210) target = $region28
        $region27: #{tpu_custom_call.1} parent=11 // pred_region
          _
        $region28: #{tpu_custom_call.1} parent=11 // pred_fallthru
          _
      $region12: #{tpu_custom_call.1} parent=5 // pred_fallthru
        _
      %p213 = scmp.lt.s32.totalorder %s19, 2
      // Predicated region
      $region29: #{tpu_custom_call.1} parent=5 // pred_check
        %p214 = pneg %p213
      $region30: #{tpu_custom_call.1} parent=5 // pred_check_branch
        %216 = sbr.rel (%p214) target = $region32
      $region31: #{tpu_custom_call.1} parent=5 // pred_region
        // Predicated region
        $region33: #{tpu_custom_call.1} parent=31 // pred_check
          %p217 = pneg %p39
        $region34: #{tpu_custom_call.1} parent=31 // pred_check_branch
          %219 = sbr.rel (%p217) target = $region36
        $region35: #{tpu_custom_call.1} parent=31 // pred_region
          %s220 = sand.u32 %s29, 1
          %s221 = scalar_lea.sflag [#allocation3], %s220
          %s222 = sand.u32 %s29, 1
          %s223 = smul.addr %s222, 8
          %s224 = scalar_lea.vmem [#allocation2], %s223
          %226 = vsyncadd %s221, 0
          %s227 = smul.addr %s19, 8
          %s228 = scalar_lea.hbm %s0, %s227
          %s230 = sshll.u32 %s228, 4
          %s231 = int_to_ptr.hbm [resolvable:$true] %s230
          %s232 = sshll.u32 %s224, 4
          %s233 = int_to_ptr.vmem [resolvable:$true] %s232
          %235 = dma.hbm_to_vmem [thread:$0]  %s231, 128, %s233, %s221
        $region36: #{tpu_custom_call.1} parent=31 // pred_fallthru
          _
      $region32: #{tpu_custom_call.1} parent=5 // pred_fallthru
        _
      %p236 = scmp.le.s32.totalorder 1, %s19
      %p237 = scmp.lt.s32.totalorder %s19, 3
      %p238 = pnand %p236, %p237
      %p239 = pneg %p238
      // Predicated region
      $region37: #{tpu_custom_call.1} parent=5 // pred_check
        _
      $region38: #{tpu_custom_call.1} parent=5 // pred_check_branch
        %241 = sbr.rel (%p238) target = $region40
      $region39: #{tpu_custom_call.1} parent=5 // pred_region
        %s242 = ssub.s32 %s19, 1
        %s243 = sand.u32 %s32, 1
        %s244 = scalar_lea.sflag [#allocation3], %s243
        %s245 = sand.u32 %s32, 1
        %s246 = smul.addr %s245, 8
        %s247 = scalar_lea.vmem [#allocation2], %s246
        // Predicated region
        $region41: #{tpu_custom_call.1} parent=39 // pred_check
          %p248 = pneg %p45
        $region42: #{tpu_custom_call.1} parent=39 // pred_check_branch
          %250 = sbr.rel (%p248) target = $region44
        $region43: #{tpu_custom_call.1} parent=39 // pred_region
          %252 = dma.done %s244, 128
        $region44: #{tpu_custom_call.1} parent=39 // pred_fallthru
          _
        // Predicated region
        $region45: #{tpu_custom_call.1} parent=39 // pred_check
          %p253 = pneg %p66
        $region46: #{tpu_custom_call.1} parent=39 // pred_check_branch
          %255 = sbr.rel (%p253) target = $region48
        $region47: #{tpu_custom_call.1} parent=39 // pred_region
          %257 = dma.done [#allocation6], 4096
        $region48: #{tpu_custom_call.1} parent=39 // pred_fallthru
          _
        // Predicated region
        $region49: #{tpu_custom_call.1} parent=39 // pred_check
          %p258 = pneg %p87
        $region50: #{tpu_custom_call.1} parent=39 // pred_check_branch
          %260 = sbr.rel (%p258) target = $region52
        $region51: #{tpu_custom_call.1} parent=39 // pred_region
          %262 = dma.done [#allocation6], 32
        $region52: #{tpu_custom_call.1} parent=39 // pred_fallthru
          _
        // Predicated region
        $region53: #{tpu_custom_call.1} parent=39 // pred_check
          %p263 = pneg %p108
        $region54: #{tpu_custom_call.1} parent=39 // pred_check_branch
          %265 = sbr.rel (%p263) target = $region56
        $region55: #{tpu_custom_call.1} parent=39 // pred_region
          %267 = dma.done [#allocation9], 4096
        $region56: #{tpu_custom_call.1} parent=39 // pred_fallthru
          _
        %s268 = sand.u32 %s32, 1
        %s269 = scalar_lea.sflag [#allocation3], %s268
        %s270 = sand.u32 %s32, 1
        %s271 = smul.addr %s270, 8
        %s272 = scalar_lea.vmem [#allocation2], %s271
        %p273 = pneg %p45
        %p274 = pneg %p42
        %p275 = pneg %p66
        %p276 = pneg %p63
        %p277 = pneg %p87
        %p278 = pneg %p84
        %p279 = pneg %p108
        %p280 = pneg %p105
        %p281 = pneg %p129
        %p282 = pneg %p126
        %p283 = pneg %p155
        %p284 = pneg %p152
        %s285 = sand.u32 %s142, 1
        %s286 = scalar_lea.sflag [#allocation4], %s285
        %s287 = sand.u32 %s142, 1
        %s288 = smul.addr %s287, 8
        %s289 = scalar_lea.vmem [#allocation10], %s288
        %v290 = vld [vmem:[%s247] sm:$0xff]
        %v291 = vld [vmem:[#allocation5] sm:$0xff]
        %v292 = vld [vmem:[#allocation5 + $0x8] sm:$0xff]
        %v293 = vld [vmem:[#allocation5 + $0x10] sm:$0xff]
        %v294 = vld [vmem:[#allocation5 + $0x18] sm:$0xff]
        %v295 = vld [vmem:[#allocation5 + $0x20] sm:$0xff]
        %v296 = vld [vmem:[#allocation5 + $0x28] sm:$0xff]
        %v297 = vld [vmem:[#allocation5 + $0x30] sm:$0xff]
        %v298 = vld [vmem:[#allocation5 + $0x38] sm:$0xff]
        %v299 = vld [vmem:[#allocation5 + $0x40] sm:$0xff]
        %v300 = vld [vmem:[#allocation5 + $0x48] sm:$0xff]
        %v301 = vld [vmem:[#allocation5 + $0x50] sm:$0xff]
        %v302 = vld [vmem:[#allocation5 + $0x58] sm:$0xff]
        %v303 = vld [vmem:[#allocation5 + $0x60] sm:$0xff]
        %v304 = vld [vmem:[#allocation5 + $0x68] sm:$0xff]
        %v305 = vld [vmem:[#allocation5 + $0x70] sm:$0xff]
        %v306 = vld [vmem:[#allocation5 + $0x78] sm:$0xff]
        %v307 = vld [vmem:[#allocation5 + $0x80] sm:$0xff]
        %v308 = vld [vmem:[#allocation5 + $0x88] sm:$0xff]
        %v309 = vld [vmem:[#allocation5 + $0x90] sm:$0xff]
        %v310 = vld [vmem:[#allocation5 + $0x98] sm:$0xff]
        %v311 = vld [vmem:[#allocation5 + $0xa0] sm:$0xff]
        %v312 = vld [vmem:[#allocation5 + $0xa8] sm:$0xff]
        %v313 = vld [vmem:[#allocation5 + $0xb0] sm:$0xff]
        %v314 = vld [vmem:[#allocation5 + $0xb8] sm:$0xff]
        %v315 = vld [vmem:[#allocation5 + $0xc0] sm:$0xff]
        %v316 = vld [vmem:[#allocation5 + $0xc8] sm:$0xff]
        %v317 = vld [vmem:[#allocation5 + $0xd0] sm:$0xff]
        %v318 = vld [vmem:[#allocation5 + $0xd8] sm:$0xff]
        %v319 = vld [vmem:[#allocation5 + $0xe0] sm:$0xff]
        %v320 = vld [vmem:[#allocation5 + $0xe8] sm:$0xff]
        %v321 = vld [vmem:[#allocation5 + $0xf0] sm:$0xff]
        %v322 = vld [vmem:[#allocation5 + $0xf8] sm:$0xff]
        %v323 = vld [vmem:[#allocation7] sm:$0x3]
        %v325 = vperm.slane %v323, 0
        %v326 = vperm.slane %v323, 1
        %329 = vmatpush.msra.mxu0 %v321
        %330 = vmatpush.msra.mxu0 %v319
        %331 = vmatpush.msra.mxu0 %v317
        %332 = vmatpush.msra.mxu0 %v315
        %333 = vmatpush.msra.mxu0 %v313
        %334 = vmatpush.msra.mxu0 %v311
        %335 = vmatpush.msra.mxu0 %v309
        %336 = vmatpush.msra.mxu0 %v307
        %337 = vmatpush.msra.mxu0 %v305
        %338 = vmatpush.msra.mxu0 %v303
        %339 = vmatpush.msra.mxu0 %v301
        %340 = vmatpush.msra.mxu0 %v299
        %341 = vmatpush.msra.mxu0 %v297
        %342 = vmatpush.msra.mxu0 %v295
        %343 = vmatpush.msra.mxu0 %v293
        %344 = vmatpush.msra.mxu0 %v291
        %345 = vmatmul.f32.gmra.mxu0 %v290
        %v346 = vpop.f32.mrf.mxu0
        %v347 = vadd.f32 %v325, %v346
        %348 = vdwg.mxu0
        %349 = vmatpush.msra.mxu0 %v322
        %350 = vmatpush.msra.mxu0 %v320
        %351 = vmatpush.msra.mxu0 %v318
        %352 = vmatpush.msra.mxu0 %v316
        %353 = vmatpush.msra.mxu0 %v314
        %354 = vmatpush.msra.mxu0 %v312
        %355 = vmatpush.msra.mxu0 %v310
        %356 = vmatpush.msra.mxu0 %v308
        %357 = vmatpush.msra.mxu0 %v306
        %358 = vmatpush.msra.mxu0 %v304
        %359 = vmatpush.msra.mxu0 %v302
        %360 = vmatpush.msra.mxu0 %v300
        %361 = vmatpush.msra.mxu0 %v298
        %362 = vmatpush.msra.mxu0 %v296
        %363 = vmatpush.msra.mxu0 %v294
        %364 = vmatpush.msra.mxu0 %v292
        %365 = vmatmul.f32.gmra.mxu0 %v290
        %v366 = vpop.f32.mrf.mxu0
        %v367 = vadd.f32 %v326, %v366
        %368 = vdwg.mxu0
        %v369 = vmul.f32 %v347, 0.5
        %v370 = vmul.f32 %v367, 0.5
        %v371 = vmul.f32 %v347, 0.70710677
        %v372 = vmul.f32 %v367, 0.70710677
        %v373 = vmul.f32 %v371, %v371
        %v374 = vmin.f32 16.0, %v373
        %v375 = vmul.f32 %v374, 2.1237322e-06
        %v376 = vadd.f32 %v375, 0.00028619796
        %v377 = vmul.f32 %v374, %v376
        %v378 = vadd.f32 %v377, 0.0036580483
        %v379 = vmul.f32 %v374, %v378
        %v380 = vadd.f32 %v379, 0.05243302
        %v381 = vmul.f32 %v374, %v380
        %v382 = vadd.f32 %v381, 0.18741608
        %v383 = vmul.f32 %v374, %v382
        %v384 = vadd.f32 %v383, 1.1283791
        %v385 = vmul.f32 %v371, %v384
        %v386 = vmul.f32 %v374, 3.8918573e-05
        %v387 = vadd.f32 %v386, 0.001143296
        %v388 = vmul.f32 %v374, %v387
        %v389 = vadd.f32 %v388, 0.014752088
        %v390 = vmul.f32 %v374, %v389
        %v391 = vadd.f32 %v390, 0.112945676
        %v392 = vmul.f32 %v374, %v391
        %v393 = vadd.f32 %v392, 0.4994258
        %v394 = vmul.f32 %v374, %v393
        %v395 = vadd.f32 %v394, 1.0
        %v396 = vrcp.pop %v395
        %v397 = vmul.f32 %v395, %v396
        %v398 = vsub.f32 1.0, %v397
        %v399 = vmul.f32 %v396, %v398
        %v400 = vadd.f32 %v396, %v399
        %vm401 = vweird.f32 %v395
        %vm402 = vweird.f32 %v396
        %vm403 = vmor %vm401, %vm402
        %v404 = vsel %vm403, %v396, %v400
        %v405 = vand.u32 2147483647, %v395
        %vm406 = vcmp.eq.f32.partialorder %v405, 8.507059e+37
        %v407 = vand.u32 %v395, 2147483648
        %v408 = vor.u32 1.1754944e-38, %v407
        %v409 = vsel %vm406, %v408, %v404
        %v410 = vmul.f32 %v385, %v409
        %v411 = vmin.f32 %v410, 1.0
        %v412 = vmax.f32 %v411, -1.0
        %v413 = vmul.f32 %v372, %v372
        %v414 = vmin.f32 16.0, %v413
        %v415 = vmul.f32 %v414, 2.1237322e-06
        %v416 = vadd.f32 %v415, 0.00028619796
        %v417 = vmul.f32 %v414, %v416
        %v418 = vadd.f32 %v417, 0.0036580483
        %v419 = vmul.f32 %v414, %v418
        %v420 = vadd.f32 %v419, 0.05243302
        %v421 = vmul.f32 %v414, %v420
        %v422 = vadd.f32 %v421, 0.18741608
        %v423 = vmul.f32 %v414, %v422
        %v424 = vadd.f32 %v423, 1.1283791
        %v425 = vmul.f32 %v372, %v424
        %v426 = vmul.f32 %v414, 3.8918573e-05
        %v427 = vadd.f32 %v426, 0.001143296
        %v428 = vmul.f32 %v414, %v427
        %v429 = vadd.f32 %v428, 0.014752088
        %v430 = vmul.f32 %v414, %v429
        %v431 = vadd.f32 %v430, 0.112945676
        %v432 = vmul.f32 %v414, %v431
        %v433 = vadd.f32 %v432, 0.4994258
        %v434 = vmul.f32 %v414, %v433
        %v435 = vadd.f32 %v434, 1.0
        %v436 = vrcp.pop %v435
        %v437 = vmul.f32 %v435, %v436
        %v438 = vsub.f32 1.0, %v437
        %v439 = vmul.f32 %v436, %v438
        %v440 = vadd.f32 %v436, %v439
        %vm441 = vweird.f32 %v435
        %vm442 = vweird.f32 %v436
        %vm443 = vmor %vm441, %vm442
        %v444 = vsel %vm443, %v436, %v440
        %v445 = vand.u32 2147483647, %v435
        %vm446 = vcmp.eq.f32.partialorder %v445, 8.507059e+37
        %v447 = vand.u32 %v435, 2147483648
        %v448 = vor.u32 1.1754944e-38, %v447
        %v449 = vsel %vm446, %v448, %v444
        %v450 = vmul.f32 %v425, %v449
        %v451 = vmin.f32 %v450, 1.0
        %v452 = vmax.f32 %v451, -1.0
        %v453 = vadd.f32 %v412, 1.0
        %v454 = vadd.f32 %v452, 1.0
        %v455 = vmul.f32 %v369, %v453
        %v456 = vmul.f32 %v370, %v454
        %v457 = vld [vmem:[#allocation8] sm:$0xff]
        %v458 = vld [vmem:[#allocation8 + $0x8] sm:$0xff]
        %v459 = vld [vmem:[#allocation8 + $0x10] sm:$0xff]
        %v460 = vld [vmem:[#allocation8 + $0x18] sm:$0xff]
        %v461 = vld [vmem:[#allocation8 + $0x20] sm:$0xff]
        %v462 = vld [vmem:[#allocation8 + $0x28] sm:$0xff]
        %v463 = vld [vmem:[#allocation8 + $0x30] sm:$0xff]
        %v464 = vld [vmem:[#allocation8 + $0x38] sm:$0xff]
        %v465 = vld [vmem:[#allocation8 + $0x40] sm:$0xff]
        %v466 = vld [vmem:[#allocation8 + $0x48] sm:$0xff]
        %v467 = vld [vmem:[#allocation8 + $0x50] sm:$0xff]
        %v468 = vld [vmem:[#allocation8 + $0x58] sm:$0xff]
        %v469 = vld [vmem:[#allocation8 + $0x60] sm:$0xff]
        %v470 = vld [vmem:[#allocation8 + $0x68] sm:$0xff]
        %v471 = vld [vmem:[#allocation8 + $0x70] sm:$0xff]
        %v472 = vld [vmem:[#allocation8 + $0x78] sm:$0xff]
        %v473 = vld [vmem:[#allocation8 + $0x80] sm:$0xff]
        %v474 = vld [vmem:[#allocation8 + $0x88] sm:$0xff]
        %v475 = vld [vmem:[#allocation8 + $0x90] sm:$0xff]
        %v476 = vld [vmem:[#allocation8 + $0x98] sm:$0xff]
        %v477 = vld [vmem:[#allocation8 + $0xa0] sm:$0xff]
        %v478 = vld [vmem:[#allocation8 + $0xa8] sm:$0xff]
        %v479 = vld [vmem:[#allocation8 + $0xb0] sm:$0xff]
        %v480 = vld [vmem:[#allocation8 + $0xb8] sm:$0xff]
        %v481 = vld [vmem:[#allocation8 + $0xc0] sm:$0xff]
        %v482 = vld [vmem:[#allocation8 + $0xc8] sm:$0xff]
        %v483 = vld [vmem:[#allocation8 + $0xd0] sm:$0xff]
        %v484 = vld [vmem:[#allocation8 + $0xd8] sm:$0xff]
        %v485 = vld [vmem:[#allocation8 + $0xe0] sm:$0xff]
        %v486 = vld [vmem:[#allocation8 + $0xe8] sm:$0xff]
        %v487 = vld [vmem:[#allocation8 + $0xf0] sm:$0xff]
        %v488 = vld [vmem:[#allocation8 + $0xf8] sm:$0xff]
        %v489 = vld [vmem:[%s4] sm:$0x1]
        %v491 = vperm.slane %v489, 0
        %493 = vmatpush.msra.mxu0 %v472
        %494 = vmatpush.msra.mxu0 %v471
        %495 = vmatpush.msra.mxu0 %v470
        %496 = vmatpush.msra.mxu0 %v469
        %497 = vmatpush.msra.mxu0 %v468
        %498 = vmatpush.msra.mxu0 %v467
        %499 = vmatpush.msra.mxu0 %v466
        %500 = vmatpush.msra.mxu0 %v465
        %501 = vmatpush.msra.mxu0 %v464
        %502 = vmatpush.msra.mxu0 %v463
        %503 = vmatpush.msra.mxu0 %v462
        %504 = vmatpush.msra.mxu0 %v461
        %505 = vmatpush.msra.mxu0 %v460
        %506 = vmatpush.msra.mxu0 %v459
        %507 = vmatpush.msra.mxu0 %v458
        %508 = vmatpush.msra.mxu0 %v457
        %509 = vmatmul.f32.gmra.mxu0 %v455
        %v510 = vpop.f32.mrf.mxu0
        %v511 = vadd.f32 %v491, %v510
        %512 = vdwg.mxu0
        %513 = vmatpush.msra.mxu0 %v488
        %514 = vmatpush.msra.mxu0 %v487
        %515 = vmatpush.msra.mxu0 %v486
        %516 = vmatpush.msra.mxu0 %v485
        %517 = vmatpush.msra.mxu0 %v484
        %518 = vmatpush.msra.mxu0 %v483
        %519 = vmatpush.msra.mxu0 %v482
        %520 = vmatpush.msra.mxu0 %v481
        %521 = vmatpush.msra.mxu0 %v480
        %522 = vmatpush.msra.mxu0 %v479
        %523 = vmatpush.msra.mxu0 %v478
        %524 = vmatpush.msra.mxu0 %v477
        %525 = vmatpush.msra.mxu0 %v476
        %526 = vmatpush.msra.mxu0 %v475
        %527 = vmatpush.msra.mxu0 %v474
        %528 = vmatpush.msra.mxu0 %v473
        %529 = vmatmul.f32.gmra.mxu0 %v456
        %v530 = vpop.f32.mrf.mxu0
        %v531 = vadd.f32 %v511, %v530
        %532 = vdwg.mxu0
        %533 = vst [vmem:[%s289] sm:$0xff] %v531
        %s534 = sand.u32 %s142, 1
        %s535 = scalar_lea.sflag [#allocation4], %s534
        %s536 = sand.u32 %s142, 1
        %s537 = smul.addr %s536, 8
        %s538 = scalar_lea.vmem [#allocation10], %s537
        // Predicated region
        $region57: #{tpu_custom_call.1} parent=39 // pred_check
          %p539 = pneg %p152
        $region58: #{tpu_custom_call.1} parent=39 // pred_check_branch
          %541 = sbr.rel (%p539) target = $region60
        $region59: #{tpu_custom_call.1} parent=39 // pred_region
          %543 = vsyncadd %s535, 0
          %s544 = smul.addr %s24, 8
          %s545 = scalar_lea.hbm %s5, %s544
          %s547 = sshll.u32 %s538, 4
          %s548 = int_to_ptr.vmem [resolvable:$true] %s547
          %s549 = sshll.u32 %s545, 4
          %s550 = int_to_ptr.hbm [resolvable:$true] %s549
          %552 = dma.vmem_to_hbm [thread:$0]  %s548, 128, %s550, %s535
        $region60: #{tpu_custom_call.1} parent=39 // pred_fallthru
          _
      $region40: #{tpu_custom_call.1} parent=5 // pred_fallthru
        _
      %p553 = scmp.le.s32.totalorder 2, %s19
      // Predicated region
      $region61: #{tpu_custom_call.1} parent=5 // pred_check
        %p554 = pneg %p553
      $region62: #{tpu_custom_call.1} parent=5 // pred_check_branch
        %556 = sbr.rel (%p554) target = $region64
      $region63: #{tpu_custom_call.1} parent=5 // pred_region
        %s557 = ssub.s32 %s19, 2
        // Predicated region
        $region65: #{tpu_custom_call.1} parent=63 // pred_check
          %p558 = pneg %p158
        $region66: #{tpu_custom_call.1} parent=63 // pred_check_branch
          %560 = sbr.rel (%p558) target = $region68
        $region67: #{tpu_custom_call.1} parent=63 // pred_region
          %s561 = sand.u32 %s143, 1
          %s562 = scalar_lea.sflag [#allocation4], %s561
          %s563 = sand.u32 %s143, 1
          %s564 = smul.addr %s563, 8
          %s565 = scalar_lea.vmem [#allocation10], %s564
          %567 = dma.done %s562, 128
        $region68: #{tpu_custom_call.1} parent=63 // pred_fallthru
          _
      $region64: #{tpu_custom_call.1} parent=5 // pred_fallthru
        _
    $region6: #{tpu_custom_call.1} parent=1 // loop_footer
      %s23 = sadd.s32 1, %s19
    $region7: #{tpu_custom_call.1} parent=1 // loop_footer_branch
      %18 = sbr.rel target = $region3
    $region8: #{tpu_custom_call.1} parent=1 // loop_exit
      _
    %568 = vsyncpa [#allocation3], 1
    %s569 = scalar_lea.sflag [#allocation3], 1
    %570 = vsyncpa %s569, 1
    %571 = vsyncpa [#allocation6], 1
    %572 = vsyncpa [#allocation9], 1
    %573 = vsyncpa [#allocation4], 1
    %s574 = scalar_lea.sflag [#allocation4], 1
    %575 = vsyncpa %s574, 1

</llo_original>
